<compile_context>
chip_gen: v5e
topology: v5e:2x2
jax: 0.10.0
libtpu: 0.0.40
codegen_flags: <defaults>
</compile_context>

<pallas_src>
import functools

import jax
import jax.numpy as jnp
from jax import lax
from jax.experimental import pallas as pl
from jax.experimental.pallas import tpu as pltpu

LN_EPS = 1e-5
_H_CHUNK = 256        # hidden_s chunk size (multiple of 256 suits v6e/v7x MXU)


def _round_up(x, m):
    return (x + m - 1) // m * m


def _make_kernel(P, D, h_chunk, n_chunks, gelu_approximate):
    def kernel(x_ref, gamma_ref, beta_ref, w1_ref, b1_ref, w2_ref, b2_ref,
               o_ref):
        # x_ref: (1, P, D) slab in the model's native dtype.
        x = x_ref[0].astype(jnp.float32)                         # (P, D) f32

        # ---- fused LayerNorm over hidden_size (f32 on VPU/XLU) ----
        mean = jnp.mean(x, axis=-1, keepdims=True)               # (P, 1)
        var = jnp.mean(jnp.square(x - mean), axis=-1, keepdims=True)
        rstd = lax.rsqrt(var + LN_EPS)
        y = (x - mean) * rstd * gamma_ref[...] + beta_ref[...]   # (P, D) f32
        y_bf = y.astype(jnp.bfloat16)

        def fc_block(w1_blk, b1_blk, w2_blk):
            # fc1 (mix patches): (h, P) @ (P, D) -> (h, D), f32 accumulation.
            h = jnp.dot(w1_blk, y_bf, preferred_element_type=jnp.float32)
            h = h + b1_blk                                       # b1: (h, 1)
            # GELU: tanh approximation -> EUP (exact erf would be a long f32
            # polynomial on the VALU).
            a = jax.nn.gelu(h, approximate=gelu_approximate)
            # fc2 partial: (P, h) @ (h, D) -> (P, D), f32 accumulation.
            return jnp.dot(w2_blk, a.astype(jnp.bfloat16),
                           preferred_element_type=jnp.float32)

        if n_chunks == 1:
            o = fc_block(w1_ref[...], b1_ref[...], w2_ref[...])
        else:
            # Chunk the H axis so the (H, D) intermediates stay small.
            def body(c, acc):
                hs = pl.multiple_of(c * h_chunk, h_chunk)
                return acc + fc_block(w1_ref[pl.ds(hs, h_chunk), :],
                                      b1_ref[pl.ds(hs, h_chunk), :],
                                      w2_ref[:, pl.ds(hs, h_chunk)])
            o = lax.fori_loop(0, n_chunks, body,
                              jnp.zeros((P, D), jnp.float32),
                              unroll=n_chunks <= 8)

        o = o + b2_ref[...]                                      # b2: (P, 1)
        # Residual + single store in the model's native dtype (no wrapper
        # post-slice, output written to HBM exactly once).
        o_ref[0] = (o + x).astype(o_ref.dtype)

    return kernel


@functools.partial(jax.jit, static_argnames=("gelu_approximate",))
def mlp1_forward(x, gamma, beta, w1, b1, w2, b2, *, gelu_approximate=True):
    B, P, D = x.shape
    H = w1.shape[0]

    # In-kernel H chunking only when H is large.  Zero-padding H is exact:
    # padded rows give h = 0, gelu(0) = 0, and the padded w2 columns are 0.
    if H > _H_CHUNK:
        h_chunk = _H_CHUNK
        H_pad = _round_up(H, h_chunk)
    else:
        h_chunk = H
        H_pad = H
    n_chunks = H_pad // h_chunk
    pad_h = H_pad - H

    # One-time, weight-sized prep only (no activation-sized copies / padding).
    gamma_r = gamma.reshape(1, D).astype(jnp.float32)
    beta_r = beta.reshape(1, D).astype(jnp.float32)
    w1_bf = jnp.pad(w1.astype(jnp.bfloat16), ((0, pad_h), (0, 0)))  # (H_pad, P)
    w2_bf = jnp.pad(w2.astype(jnp.bfloat16), ((0, 0), (0, pad_h)))  # (P, H_pad)
    b1_c = jnp.pad(b1.astype(jnp.float32), ((0, pad_h),)).reshape(H_pad, 1)
    b2_c = b2.reshape(P, 1).astype(jnp.float32)

    kernel = _make_kernel(P, D, h_chunk, n_chunks, gelu_approximate)

    bytes_x = B * P * D * x.dtype.itemsize
    cost = pl.CostEstimate(
        flops=4 * B * H * P * D,                     # two matmuls
        transcendentals=B * H * D,                   # tanh in GELU
        bytes_accessed=(2 * bytes_x                  # x in + out (native dtype)
                        + 2 * H_pad * P * 2          # bf16 weights
                        + (H_pad + P) * 4            # biases
                        + 2 * D * 4))                # gamma / beta

    out = pl.pallas_call(
        kernel,
        out_shape=jax.ShapeDtypeStruct((B, P, D), x.dtype),
        grid_spec=pltpu.PrefetchScalarGridSpec(
            num_scalar_prefetch=0,
            grid=(B,),
            in_specs=[
                pl.BlockSpec((1, P, D), lambda b: (b, 0, 0)),       # x slab
                pl.BlockSpec((1, D), lambda b: (0, 0)),             # gamma
                pl.BlockSpec((1, D), lambda b: (0, 0)),             # beta
                pl.BlockSpec((H_pad, P), lambda b: (0, 0)),         # w1 (bf16)
                pl.BlockSpec((H_pad, 1), lambda b: (0, 0)),         # b1
                pl.BlockSpec((P, H_pad), lambda b: (0, 0)),         # w2 (bf16)
                pl.BlockSpec((P, 1), lambda b: (0, 0)),             # b2
            ],
            out_specs=pl.BlockSpec((1, P, D), lambda b: (b, 0, 0)),
        ),
        compiler_params=pltpu.CompilerParams(
            dimension_semantics=("parallel",)),
        cost_estimate=cost,
    )(x, gamma_r, beta_r, w1_bf, b1_c, w2_bf, b2_c)

    return out


def reference_forward(x, gamma, beta, w1, b1, w2, b2, *,
                      bf16_matmul=False, gelu_approximate=False):
    """Pure-JAX reference.  bf16_matmul / gelu_approximate mirror the kernel."""
    xf = x.astype(jnp.float32)
    mean = jnp.mean(xf, axis=-1, keepdims=True)
    var = jnp.mean(jnp.square(xf - mean), axis=-1, keepdims=True)
    y = (xf - mean) * lax.rsqrt(var + LN_EPS) * gamma + beta
    w1m, w2m = w1, w2
    if bf16_matmul:
        y = y.astype(jnp.bfloat16)
        w1m = w1.astype(jnp.bfloat16)
        w2m = w2.astype(jnp.bfloat16)
    h = jnp.einsum('hp,bpd->bhd', w1m, y,
                   preferred_element_type=jnp.float32) + b1[None, :, None]
    a = jax.nn.gelu(h, approximate=gelu_approximate)
    if bf16_matmul:
        a = a.astype(jnp.bfloat16)
    o = jnp.einsum('ph,bhd->bpd', w2m, a,
                   preferred_element_type=jnp.float32) + b2[None, :, None]
    return (o + xf).astype(x.dtype)


if __name__ == "__main__":
    # Small shapes consistent with the module.
    batch = 2
    num_patches = 8      # Conv1d channel dim (token/patch axis)
    hidden_size = 16     # LayerNorm dim (lane axis)
    hidden_s = 32        # fc1 output channels

    key = jax.random.PRNGKey(0)
    kx, kg, kb, kw1, kb1, kw2, kb2 = jax.random.split(key, 7)

    x = jax.random.normal(kx, (batch, num_patches, hidden_size), jnp.float32)
    gamma = 1.0 + 0.1 * jax.random.normal(kg, (hidden_size,), jnp.float32)
    beta = 0.1 * jax.random.normal(kb, (hidden_size,), jnp.float32)
    w1 = 0.1 * jax.random.normal(kw1, (hidden_s, num_patches), jnp.float32)
    b1 = 0.1 * jax.random.normal(kb1, (hidden_s,), jnp.float32)
    w2 = 0.1 * jax.random.normal(kw2, (num_patches, hidden_s), jnp.float32)
    b2 = 0.1 * jax.random.normal(kb2, (num_patches,), jnp.float32)

    out = jax.block_until_ready(mlp1_forward(x, gamma, beta, w1, b1, w2, b2))
    assert out.shape == (batch, num_patches, hidden_size)
    assert out.dtype == x.dtype

    # Tight check vs a reference that mirrors the kernel's bf16 MXU operands
    # and tanh-approx GELU (f32 accumulation everywhere).
    ref_match = reference_forward(x, gamma, beta, w1, b1, w2, b2,
                                  bf16_matmul=True, gelu_approximate=True)
    err_match = jnp.max(jnp.abs(out - ref_match))
    assert jnp.allclose(out, ref_match, atol=2e-3, rtol=2e-3), (
        f"max err vs matched reference: {err_match}")

    # Loose check vs the full-f32, exact-erf PyTorch-equivalent reference
    # (bf16 MXU operands + tanh GELU are the only deviations).
    ref_f32 = reference_forward(x, gamma, beta, w1, b1, w2, b2,
                                bf16_matmul=False, gelu_approximate=False)
    err_f32 = jnp.max(jnp.abs(out - ref_f32))
    assert jnp.allclose(out, ref_f32, atol=5e-2, rtol=5e-2), (
        f"max err vs f32 reference: {err_f32}")

    print("KERNEL_OK")
</pallas_src>

<mosaic_0001>
module attributes {stable_mosaic.version = 11 : i64} {
  func.func @kernel(%arg0: i32, %arg1: memref<1x8x16xf32, #tpu.memory_space<vmem>>, %arg2: memref<1x16xf32, #tpu.memory_space<vmem>>, %arg3: memref<1x16xf32, #tpu.memory_space<vmem>>, %arg4: memref<32x8xbf16, #tpu.memory_space<vmem>>, %arg5: memref<32x1xf32, #tpu.memory_space<vmem>>, %arg6: memref<8x32xbf16, #tpu.memory_space<vmem>>, %arg7: memref<8x1xf32, #tpu.memory_space<vmem>>, %arg8: memref<1x8x16xf32, #tpu.memory_space<vmem>>) attributes {dimension_semantics = [#tpu.dimension_semantics<parallel>], iteration_bounds = array<i64: 2>, scalar_prefetch = 0 : i64, scratch_operands = 0 : i64, tpu.core_type = #tpu.core_type<tc>, window_params = [{transform_indices = @transform_0, window_bounds = array<i64: 1, 8, 16>}, {pipeline_mode = #tpu.pipeline_mode<synchronous>, transform_indices = @transform_1, window_bounds = array<i64: 1, 16>}, {pipeline_mode = #tpu.pipeline_mode<synchronous>, transform_indices = @transform_2, window_bounds = array<i64: 1, 16>}, {pipeline_mode = #tpu.pipeline_mode<synchronous>, transform_indices = @transform_3, window_bounds = array<i64: 32, 8>}, {pipeline_mode = #tpu.pipeline_mode<synchronous>, transform_indices = @transform_4, window_bounds = array<i64: 32, 1>}, {pipeline_mode = #tpu.pipeline_mode<synchronous>, transform_indices = @transform_5, window_bounds = array<i64: 8, 32>}, {pipeline_mode = #tpu.pipeline_mode<synchronous>, transform_indices = @transform_6, window_bounds = array<i64: 8, 1>}, {transform_indices = @transform_7, window_bounds = array<i64: 1, 8, 16>}]} {
    %c0 = arith.constant 0 : index
    %c0_0 = arith.constant 0 : index
    %c0_1 = arith.constant 0 : index
    %0 = vector.load %arg1[%c0, %c0_0, %c0_1] : memref<1x8x16xf32, #tpu.memory_space<vmem>>, vector<1x8x16xf32>
    %1 = vector.shape_cast %0 : vector<1x8x16xf32> to vector<8x16xf32>
    %cst = arith.constant dense<0.000000e+00> : vector<8xf32>
    %2 = vector.multi_reduction <add>, %1, %cst [1] : vector<8x16xf32> to vector<8xf32>
    %3 = vector.shape_cast %2 : vector<8xf32> to vector<8x1xf32>
    %cst_2 = arith.constant 1.600000e+01 : f32
    %4 = vector.broadcast %cst_2 : f32 to vector<8x1xf32>
    %5 = arith.divf %3, %4 : vector<8x1xf32>
    %6 = vector.broadcast %5 : vector<8x1xf32> to vector<8x16xf32>
    %7 = arith.subf %1, %6 : vector<8x16xf32>
    %8 = arith.mulf %7, %7 : vector<8x16xf32>
    %cst_3 = arith.constant dense<0.000000e+00> : vector<8xf32>
    %9 = vector.multi_reduction <add>, %8, %cst_3 [1] : vector<8x16xf32> to vector<8xf32>
    %10 = vector.shape_cast %9 : vector<8xf32> to vector<8x1xf32>
    %cst_4 = arith.constant 1.600000e+01 : f32
    %11 = vector.broadcast %cst_4 : f32 to vector<8x1xf32>
    %12 = arith.divf %10, %11 : vector<8x1xf32>
    %cst_5 = arith.constant 9.99999974E-6 : f32
    %13 = vector.broadcast %cst_5 : f32 to vector<8x1xf32>
    %14 = arith.addf %12, %13 : vector<8x1xf32>
    %15 = math.rsqrt %14 : vector<8x1xf32>
    %16 = vector.broadcast %5 : vector<8x1xf32> to vector<8x16xf32>
    %17 = arith.subf %1, %16 : vector<8x16xf32>
    %18 = vector.broadcast %15 : vector<8x1xf32> to vector<8x16xf32>
    %19 = arith.mulf %17, %18 : vector<8x16xf32>
    %c0_6 = arith.constant 0 : index
    %c0_7 = arith.constant 0 : index
    %20 = vector.load %arg2[%c0_6, %c0_7] : memref<1x16xf32, #tpu.memory_space<vmem>>, vector<1x16xf32>
    %21 = vector.broadcast %20 : vector<1x16xf32> to vector<8x16xf32>
    %22 = arith.mulf %19, %21 : vector<8x16xf32>
    %c0_8 = arith.constant 0 : index
    %c0_9 = arith.constant 0 : index
    %23 = vector.load %arg3[%c0_8, %c0_9] : memref<1x16xf32, #tpu.memory_space<vmem>>, vector<1x16xf32>
    %24 = vector.broadcast %23 : vector<1x16xf32> to vector<8x16xf32>
    %25 = arith.addf %22, %24 : vector<8x16xf32>
    %26 = arith.truncf %25 : vector<8x16xf32> to vector<8x16xbf16>
    %c0_10 = arith.constant 0 : index
    %c0_11 = arith.constant 0 : index
    %27 = vector.load %arg4[%c0_10, %c0_11] : memref<32x8xbf16, #tpu.memory_space<vmem>>, vector<32x8xbf16>
    %c0_12 = arith.constant 0 : index
    %c0_13 = arith.constant 0 : index
    %28 = vector.load %arg5[%c0_12, %c0_13] : memref<32x1xf32, #tpu.memory_space<vmem>>, vector<32x1xf32>
    %c0_14 = arith.constant 0 : index
    %c0_15 = arith.constant 0 : index
    %29 = vector.load %arg6[%c0_14, %c0_15] : memref<8x32xbf16, #tpu.memory_space<vmem>>, vector<8x32xbf16>
    %cst_16 = arith.constant dense<0.000000e+00> : vector<32x16xf32>
    %30 = tpu.matmul %27, %26, %cst_16 {dimension_numbers = #tpu.dot_dimension_numbers<[1], [0], [0], [1], [0, 0, 1, 1], [], []>} : vector<32x8xbf16>, vector<8x16xbf16>, vector<32x16xf32> -> vector<32x16xf32>
    %31 = vector.broadcast %28 : vector<32x1xf32> to vector<32x16xf32>
    %32 = arith.addf %30, %31 : vector<32x16xf32>
    %33 = arith.mulf %32, %32 : vector<32x16xf32>
    %34 = arith.mulf %32, %33 : vector<32x16xf32>
    %cst_17 = arith.constant 4.471500e-02 : f32
    %35 = vector.broadcast %cst_17 : f32 to vector<32x16xf32>
    %36 = arith.mulf %35, %34 : vector<32x16xf32>
    %37 = arith.addf %32, %36 : vector<32x16xf32>
    %cst_18 = arith.constant 0.797884583 : f32
    %38 = vector.broadcast %cst_18 : f32 to vector<32x16xf32>
    %39 = arith.mulf %38, %37 : vector<32x16xf32>
    %40 = math.tanh %39 : vector<32x16xf32>
    %cst_19 = arith.constant 1.000000e+00 : f32
    %41 = vector.broadcast %cst_19 : f32 to vector<32x16xf32>
    %42 = arith.addf %41, %40 : vector<32x16xf32>
    %cst_20 = arith.constant 5.000000e-01 : f32
    %43 = vector.broadcast %cst_20 : f32 to vector<32x16xf32>
    %44 = arith.mulf %43, %42 : vector<32x16xf32>
    %45 = arith.mulf %32, %44 : vector<32x16xf32>
    %46 = arith.truncf %45 : vector<32x16xf32> to vector<32x16xbf16>
    %cst_21 = arith.constant dense<0.000000e+00> : vector<8x16xf32>
    %47 = tpu.matmul %29, %46, %cst_21 {dimension_numbers = #tpu.dot_dimension_numbers<[1], [0], [0], [1], [0, 0, 1, 1], [], []>} : vector<8x32xbf16>, vector<32x16xbf16>, vector<8x16xf32> -> vector<8x16xf32>
    %c0_22 = arith.constant 0 : index
    %c0_23 = arith.constant 0 : index
    %48 = vector.load %arg7[%c0_22, %c0_23] : memref<8x1xf32, #tpu.memory_space<vmem>>, vector<8x1xf32>
    %49 = vector.broadcast %48 : vector<8x1xf32> to vector<8x16xf32>
    %50 = arith.addf %47, %49 : vector<8x16xf32>
    %51 = arith.addf %50, %1 : vector<8x16xf32>
    %c0_24 = arith.constant 0 : index
    %c0_25 = arith.constant 0 : index
    %c0_26 = arith.constant 0 : index
    %52 = vector.load %arg8[%c0_24, %c0_25, %c0_26] : memref<1x8x16xf32, #tpu.memory_space<vmem>>, vector<1x8x16xf32>
    %53 = vector.shape_cast %52 : vector<1x8x16xf32> to vector<8x16xf32>
    %54 = vector.shape_cast %51 : vector<8x16xf32> to vector<1x8x16xf32>
    tpu.vector_store %arg8[%c0_24, %c0_25, %c0_26], %54 {strides = array<i32>} : memref<1x8x16xf32, #tpu.memory_space<vmem>>, vector<1x8x16xf32>,
    return
  }
  func.func @transform_0(%arg0: i32) -> (i32, i32, i32) {
    %c0_i32 = arith.constant 0 : i32
    %c0_i32_0 = arith.constant 0 : i32
    %c0_i32_1 = arith.constant 0 : i32
    return %arg0, %c0_i32, %c0_i32_0 : i32, i32, i32
  }
  func.func @transform_1(%arg0: i32) -> (i32, i32) {
    %c0_i32 = arith.constant 0 : i32
    %c0_i32_0 = arith.constant 0 : i32
    %c0_i32_1 = arith.constant 0 : i32
    return %c0_i32, %c0_i32_0 : i32, i32
  }
  func.func @transform_2(%arg0: i32) -> (i32, i32) {
    %c0_i32 = arith.constant 0 : i32
    %c0_i32_0 = arith.constant 0 : i32
    %c0_i32_1 = arith.constant 0 : i32
    return %c0_i32, %c0_i32_0 : i32, i32
  }
  func.func @transform_3(%arg0: i32) -> (i32, i32) {
    %c0_i32 = arith.constant 0 : i32
    %c0_i32_0 = arith.constant 0 : i32
    %c0_i32_1 = arith.constant 0 : i32
    return %c0_i32, %c0_i32_0 : i32, i32
  }
  func.func @transform_4(%arg0: i32) -> (i32, i32) {
    %c0_i32 = arith.constant 0 : i32
    %c0_i32_0 = arith.constant 0 : i32
    %c0_i32_1 = arith.constant 0 : i32
    return %c0_i32, %c0_i32_0 : i32, i32
  }
  func.func @transform_5(%arg0: i32) -> (i32, i32) {
    %c0_i32 = arith.constant 0 : i32
    %c0_i32_0 = arith.constant 0 : i32
    %c0_i32_1 = arith.constant 0 : i32
    return %c0_i32, %c0_i32_0 : i32, i32
  }
  func.func @transform_6(%arg0: i32) -> (i32, i32) {
    %c0_i32 = arith.constant 0 : i32
    %c0_i32_0 = arith.constant 0 : i32
    %c0_i32_1 = arith.constant 0 : i32
    return %c0_i32, %c0_i32_0 : i32, i32
  }
  func.func @transform_7(%arg0: i32) -> (i32, i32, i32) {
    %c0_i32 = arith.constant 0 : i32
    %c0_i32_0 = arith.constant 0 : i32
    %c0_i32_1 = arith.constant 0 : i32
    return %arg0, %c0_i32, %c0_i32_0 : i32, i32, i32
  }
}

</mosaic_0001>

<llo_original>
// kernel: mlp1_forward.1
$region0: #{mlp1_forward.1}
  #allocation0 [shape = 'u32[]', space=smem, size = 0x4, offset = 0x4, fixed_abs, tag = 'smem constant byte address 0x4 - core index']
  #allocation1 [shape = 'u32[72,128]{1,0:T(1,128)}', space=vmem, size = 0x9000, scoped, tag = 'internal scratch']
  %s0 = inlined_call_operand.vmem [shape: f32[2,8,16], index: 0, kind: input, shape index: {}]
  %s1 = inlined_call_operand.vmem [shape: f32[1,16], index: 1, kind: input, shape index: {}]
  %s2 = inlined_call_operand.vmem [shape: f32[1,16], index: 2, kind: input, shape index: {}]
  %s3 = inlined_call_operand.vmem [shape: bf16[32,8], index: 3, kind: input, shape index: {}]
  %s4 = inlined_call_operand.vmem [shape: f32[32,1], index: 4, kind: input, shape index: {}]
  %s5 = inlined_call_operand.vmem [shape: bf16[8,32], index: 5, kind: input, shape index: {}]
  %s6 = inlined_call_operand.vmem [shape: f32[8,1], index: 6, kind: input, shape index: {}]
  %s7 = inlined_call_operand.hbm [shape: f32[2,8,16], index: 7, kind: output, shape index: {}]
  %s8 = sld [smem:[#allocation0]]
  $region61: #{mlp1_forward.1} parent=0
    _
  %s10 = ssub.s32 1, %s8
  %s11 = scalar_select 0, %s10, %s8
  $region1: #{mlp1_forward.1} parent=0
    #allocation2 [shape = 'u8[8192]{0}', space=vmem, size = 0x2000, scoped, tag = 'output window, operand 0']
    #allocation3 [shape = 's32[2]{0}', space=sflag, size = 0x8, scoped, tag = 'scoped memory for mlp1_forward.1']
    %12 = vsyncpa [#allocation3], 0
    %s13 = scalar_lea.sflag [#allocation3], 1
    %14 = vsyncpa %s13, 0
    loop: start=0, step=1, limit=4
    $region2: #{mlp1_forward.1} parent=1 // loop_pre_header
      _
    $region3: #{mlp1_forward.1} parent=1 // loop_header
      %s16 = sphi 0, %s20
      %p17 = scmp.ge.s32.totalorder %s16, 4
      %s26 = sphi 0, %s28
      %s29 = sphi 0, %s26
      %s30 = sphi 0, %s29
      %s46 = sphi 0, %s30
      %s50 = sphi 0, %s50
      %s52 = sphi 0, %s50
      %s53 = sphi 0, %s52
      %s67 = sphi 0, %s53
      %s71 = sphi 0, %s71
      %s73 = sphi 0, %s71
      %s74 = sphi 0, %s73
      %s88 = sphi 0, %s74
      %s92 = sphi 0, %s92
      %s94 = sphi 0, %s92
      %s95 = sphi 0, %s94
      %s109 = sphi 0, %s95
      %s113 = sphi 0, %s113
      %s115 = sphi 0, %s113
      %s116 = sphi 0, %s115
      %s130 = sphi 0, %s116
      %s134 = sphi 0, %s134
      %s136 = sphi 0, %s134
      %s137 = sphi 0, %s136
      %s151 = sphi 0, %s137
      %s155 = sphi 0, %s155
      %s157 = sphi 0, %s155
      %s158 = sphi 0, %s157
      %s172 = sphi 0, %s158
      %s178 = sphi 0, %s180
      %s181 = sphi 0, %s178
      %s182 = sphi 0, %s181
      %s198 = sphi 0, %s182
    $region4: #{mlp1_forward.1} parent=1 // loop_header_branch
      %19 = sbr.rel (%p17) target = $region8
    $region5: #{mlp1_forward.1} parent=1 // loop_body
      %s21 = ssub.s32 %s16, 1
      %s22 = ssub.s32 %s16, 2
      %s23 = sadd.s32 %s16, 1
      %s24 = ssub.s32 %s16, %s23
      %p25 = scmp.eq.s32.totalorder %s24, 0
      %s27 = sadd.s32 %s26, 1
      %s28 = scalar_select %p25, %s26, %s27
      %p31 = pneg %p25
      %p32 = scmp.eq.s32.totalorder %s16, 1
      %p33 = por %p31, %p32
      %p34 = scmp.ne.s32.totalorder %s26, %s29
      %p35 = scmp.eq.s32.totalorder %s16, 0
      %p36 = por %p34, %p35
      %p37 = scmp.ne.s32.totalorder %s26, %s29
      %p38 = scmp.eq.s32.totalorder %s21, 1
      %p39 = por %p37, %p38
      %p40 = scmp.ne.s32.totalorder %s29, %s30
      %p41 = scmp.eq.s32.totalorder %s21, 0
      %p42 = por %p40, %p41
      %p43 = scmp.ne.s32.totalorder %s29, %s30
      %p44 = scmp.eq.s32.totalorder %s22, 1
      %p45 = por %p43, %p44
      %p47 = scmp.ne.s32.totalorder %s30, %s46
      %p48 = scmp.eq.s32.totalorder %s22, 0
      %p49 = por %p47, %p48
      %s51 = sadd.s32 %s50, 1
      %p54 = scmp.eq.s32.totalorder %s16, 1
      %p55 = scmp.ne.s32.totalorder %s50, %s52
      %p56 = scmp.eq.s32.totalorder %s16, 0
      %p57 = por %p55, %p56
      %p58 = scmp.ne.s32.totalorder %s50, %s52
      %p59 = scmp.eq.s32.totalorder %s21, 1
      %p60 = por %p58, %p59
      %p61 = scmp.ne.s32.totalorder %s52, %s53
      %p62 = scmp.eq.s32.totalorder %s21, 0
      %p63 = por %p61, %p62
      %p64 = scmp.ne.s32.totalorder %s52, %s53
      %p65 = scmp.eq.s32.totalorder %s22, 1
      %p66 = por %p64, %p65
      %p68 = scmp.ne.s32.totalorder %s53, %s67
      %p69 = scmp.eq.s32.totalorder %s22, 0
      %p70 = por %p68, %p69
      %s72 = sadd.s32 %s71, 1
      %p75 = scmp.eq.s32.totalorder %s16, 1
      %p76 = scmp.ne.s32.totalorder %s71, %s73
      %p77 = scmp.eq.s32.totalorder %s16, 0
      %p78 = por %p76, %p77
      %p79 = scmp.ne.s32.totalorder %s71, %s73
      %p80 = scmp.eq.s32.totalorder %s21, 1
      %p81 = por %p79, %p80
      %p82 = scmp.ne.s32.totalorder %s73, %s74
      %p83 = scmp.eq.s32.totalorder %s21, 0
      %p84 = por %p82, %p83
      %p85 = scmp.ne.s32.totalorder %s73, %s74
      %p86 = scmp.eq.s32.totalorder %s22, 1
      %p87 = por %p85, %p86
      %p89 = scmp.ne.s32.totalorder %s74, %s88
      %p90 = scmp.eq.s32.totalorder %s22, 0
      %p91 = por %p89, %p90
      %s93 = sadd.s32 %s92, 1
      %p96 = scmp.eq.s32.totalorder %s16, 1
      %p97 = scmp.ne.s32.totalorder %s92, %s94
      %p98 = scmp.eq.s32.totalorder %s16, 0
      %p99 = por %p97, %p98
      %p100 = scmp.ne.s32.totalorder %s92, %s94
      %p101 = scmp.eq.s32.totalorder %s21, 1
      %p102 = por %p100, %p101
      %p103 = scmp.ne.s32.totalorder %s94, %s95
      %p104 = scmp.eq.s32.totalorder %s21, 0
      %p105 = por %p103, %p104
      %p106 = scmp.ne.s32.totalorder %s94, %s95
      %p107 = scmp.eq.s32.totalorder %s22, 1
      %p108 = por %p106, %p107
      %p110 = scmp.ne.s32.totalorder %s95, %s109
      %p111 = scmp.eq.s32.totalorder %s22, 0
      %p112 = por %p110, %p111
      %s114 = sadd.s32 %s113, 1
      %p117 = scmp.eq.s32.totalorder %s16, 1
      %p118 = scmp.ne.s32.totalorder %s113, %s115
      %p119 = scmp.eq.s32.totalorder %s16, 0
      %p120 = por %p118, %p119
      %p121 = scmp.ne.s32.totalorder %s113, %s115
      %p122 = scmp.eq.s32.totalorder %s21, 1
      %p123 = por %p121, %p122
      %p124 = scmp.ne.s32.totalorder %s115, %s116
      %p125 = scmp.eq.s32.totalorder %s21, 0
      %p126 = por %p124, %p125
      %p127 = scmp.ne.s32.totalorder %s115, %s116
      %p128 = scmp.eq.s32.totalorder %s22, 1
      %p129 = por %p127, %p128
      %p131 = scmp.ne.s32.totalorder %s116, %s130
      %p132 = scmp.eq.s32.totalorder %s22, 0
      %p133 = por %p131, %p132
      %s135 = sadd.s32 %s134, 1
      %p138 = scmp.eq.s32.totalorder %s16, 1
      %p139 = scmp.ne.s32.totalorder %s134, %s136
      %p140 = scmp.eq.s32.totalorder %s16, 0
      %p141 = por %p139, %p140
      %p142 = scmp.ne.s32.totalorder %s134, %s136
      %p143 = scmp.eq.s32.totalorder %s21, 1
      %p144 = por %p142, %p143
      %p145 = scmp.ne.s32.totalorder %s136, %s137
      %p146 = scmp.eq.s32.totalorder %s21, 0
      %p147 = por %p145, %p146
      %p148 = scmp.ne.s32.totalorder %s136, %s137
      %p149 = scmp.eq.s32.totalorder %s22, 1
      %p150 = por %p148, %p149
      %p152 = scmp.ne.s32.totalorder %s137, %s151
      %p153 = scmp.eq.s32.totalorder %s22, 0
      %p154 = por %p152, %p153
      %s156 = sadd.s32 %s155, 1
      %p159 = scmp.eq.s32.totalorder %s16, 1
      %p160 = scmp.ne.s32.totalorder %s155, %s157
      %p161 = scmp.eq.s32.totalorder %s16, 0
      %p162 = por %p160, %p161
      %p163 = scmp.ne.s32.totalorder %s155, %s157
      %p164 = scmp.eq.s32.totalorder %s21, 1
      %p165 = por %p163, %p164
      %p166 = scmp.ne.s32.totalorder %s157, %s158
      %p167 = scmp.eq.s32.totalorder %s21, 0
      %p168 = por %p166, %p167
      %p169 = scmp.ne.s32.totalorder %s157, %s158
      %p170 = scmp.eq.s32.totalorder %s22, 1
      %p171 = por %p169, %p170
      %p173 = scmp.ne.s32.totalorder %s158, %s172
      %p174 = scmp.eq.s32.totalorder %s22, 0
      %p175 = por %p173, %p174
      %s176 = ssub.s32 %s16, %s23
      %p177 = scmp.eq.s32.totalorder %s176, 0
      %s179 = sadd.s32 %s178, 1
      %s180 = scalar_select %p177, %s178, %s179
      %p183 = pneg %p177
      %p184 = scmp.eq.s32.totalorder %s16, 1
      %p185 = por %p183, %p184
      %p186 = scmp.ne.s32.totalorder %s178, %s181
      %p187 = scmp.eq.s32.totalorder %s16, 0
      %p188 = por %p186, %p187
      %p189 = scmp.ne.s32.totalorder %s178, %s181
      %p190 = scmp.eq.s32.totalorder %s21, 1
      %p191 = por %p189, %p190
      %p192 = scmp.ne.s32.totalorder %s181, %s182
      %p193 = scmp.eq.s32.totalorder %s21, 0
      %p194 = por %p192, %p193
      %p195 = scmp.ne.s32.totalorder %s181, %s182
      %p196 = scmp.eq.s32.totalorder %s22, 1
      %p197 = por %p195, %p196
      %p199 = scmp.ne.s32.totalorder %s182, %s198
      %p200 = scmp.eq.s32.totalorder %s22, 0
      %p201 = por %p199, %p200
      %p202 = scmp.le.s32.totalorder 1, %s16
      %p203 = scmp.lt.s32.totalorder %s16, 3
      %p204 = pnand %p202, %p203
      %p205 = pneg %p204
      // Predicated region
      $region9: #{mlp1_forward.1} parent=5 // pred_check
        _
      $region10: #{mlp1_forward.1} parent=5 // pred_check_branch
        %207 = sbr.rel (%p204) target = $region12
      $region11: #{mlp1_forward.1} parent=5 // pred_region
        %s208 = ssub.s32 %s16, 1
        // Predicated region
        $region13: #{mlp1_forward.1} parent=11 // pred_check
          %p209 = pneg %p63
        $region14: #{mlp1_forward.1} parent=11 // pred_check_branch
          %211 = sbr.rel (%p209) target = $region16
        $region15: #{mlp1_forward.1} parent=11 // pred_region
          _
        $region16: #{mlp1_forward.1} parent=11 // pred_fallthru
          _
        // Predicated region
        $region17: #{mlp1_forward.1} parent=11 // pred_check
          %p212 = pneg %p84
        $region18: #{mlp1_forward.1} parent=11 // pred_check_branch
          %214 = sbr.rel (%p212) target = $region20
        $region19: #{mlp1_forward.1} parent=11 // pred_region
          _
        $region20: #{mlp1_forward.1} parent=11 // pred_fallthru
          _
        // Predicated region
        $region21: #{mlp1_forward.1} parent=11 // pred_check
          %p215 = pneg %p105
        $region22: #{mlp1_forward.1} parent=11 // pred_check_branch
          %217 = sbr.rel (%p215) target = $region24
        $region23: #{mlp1_forward.1} parent=11 // pred_region
          _
        $region24: #{mlp1_forward.1} parent=11 // pred_fallthru
          _
        // Predicated region
        $region25: #{mlp1_forward.1} parent=11 // pred_check
          %p218 = pneg %p126
        $region26: #{mlp1_forward.1} parent=11 // pred_check_branch
          %220 = sbr.rel (%p218) target = $region28
        $region27: #{mlp1_forward.1} parent=11 // pred_region
          _
        $region28: #{mlp1_forward.1} parent=11 // pred_fallthru
          _
        // Predicated region
        $region29: #{mlp1_forward.1} parent=11 // pred_check
          %p221 = pneg %p147
        $region30: #{mlp1_forward.1} parent=11 // pred_check_branch
          %223 = sbr.rel (%p221) target = $region32
        $region31: #{mlp1_forward.1} parent=11 // pred_region
          _
        $region32: #{mlp1_forward.1} parent=11 // pred_fallthru
          _
        // Predicated region
        $region33: #{mlp1_forward.1} parent=11 // pred_check
          %p224 = pneg %p168
        $region34: #{mlp1_forward.1} parent=11 // pred_check_branch
          %226 = sbr.rel (%p224) target = $region36
        $region35: #{mlp1_forward.1} parent=11 // pred_region
          _
        $region36: #{mlp1_forward.1} parent=11 // pred_fallthru
          _
      $region12: #{mlp1_forward.1} parent=5 // pred_fallthru
        _
      %p227 = scmp.lt.s32.totalorder %s16, 2
      // Predicated region
      $region37: #{mlp1_forward.1} parent=5 // pred_check
        %p228 = pneg %p227
      $region38: #{mlp1_forward.1} parent=5 // pred_check_branch
        %230 = sbr.rel (%p228) target = $region40
      $region39: #{mlp1_forward.1} parent=5 // pred_region
        // Predicated region
        $region41: #{mlp1_forward.1} parent=39 // pred_check
          %p231 = pneg %p36
        $region42: #{mlp1_forward.1} parent=39 // pred_check_branch
          %233 = sbr.rel (%p231) target = $region44
        $region43: #{mlp1_forward.1} parent=39 // pred_region
          %p234 = scmp.lt.s32.totalorder %s16, 1
          %s235 = scalar_select %p234, %s16, 1
          %s236 = smul.addr %s235, 8
          %s237 = scalar_lea.vmem %s0, %s236
        $region44: #{mlp1_forward.1} parent=39 // pred_fallthru
          _
      $region40: #{mlp1_forward.1} parent=5 // pred_fallthru
        _
      %p238 = scmp.le.s32.totalorder 1, %s16
      %p239 = scmp.lt.s32.totalorder %s16, 3
      %p240 = pnand %p238, %p239
      %p241 = pneg %p240
      // Predicated region
      $region45: #{mlp1_forward.1} parent=5 // pred_check
        _
      $region46: #{mlp1_forward.1} parent=5 // pred_check_branch
        %243 = sbr.rel (%p240) target = $region48
      $region47: #{mlp1_forward.1} parent=5 // pred_region
        %s244 = ssub.s32 %s16, 1
        %p245 = scmp.lt.s32.totalorder %s21, 1
        %s246 = scalar_select %p245, %s21, 1
        %s247 = smul.addr %s246, 8
        %s248 = scalar_lea.vmem %s0, %s247
        %p249 = pneg %p42
        %p250 = pneg %p39
        %p251 = pneg %p63
        %p252 = pneg %p60
        %p253 = pneg %p84
        %p254 = pneg %p81
        %p255 = pneg %p105
        %p256 = pneg %p102
        %p257 = pneg %p126
        %p258 = pneg %p123
        %p259 = pneg %p147
        %p260 = pneg %p144
        %p261 = pneg %p168
        %p262 = pneg %p165
        %p263 = pneg %p194
        %p264 = pneg %p191
        %s265 = sand.u32 %s181, 1
        %s266 = scalar_lea.sflag [#allocation3], %s265
        %s267 = sand.u32 %s181, 1
        %s268 = smul.addr %s267, 8
        %s269 = scalar_lea.vmem [#allocation2], %s268
        %p270 = scmp.lt.s32.totalorder %s21, 1
        %s271 = scalar_select %p270, %s21, 1
        %s272 = smul.addr %s271, 8
        %s273 = scalar_lea.vmem %s0, %s272
        %v275 = vld [vmem:[%s273] sm:$0xff]
        %vm276 = vcmask 130048
        %v277 = vsel %vm276, %v275, 0.0
        %278 = vadd.xlane.f32.xlu0 %v277
        %v279 = vpop.xlane.xlu0 %278
        %v280 = vrcp.pop 16.0
        %v281 = vmul.f32 16.0, %v280
        %v282 = vsub.f32 1.0, %v281
        %v283 = vmul.f32 %v280, %v282
        %v284 = vadd.f32 %v280, %v283
        %vm285 = vweird.f32 %v280
        %v286 = vsel %vm285, %v280, %v284
        %v287 = vmul.f32 %v279, %v286
        %v288 = vsub.f32 %v275, %v287
        %v289 = vmul.f32 %v288, %v288
        %v290 = vsel %vm276, %v289, 0.0
        %291 = vadd.xlane.f32.xlu0 %v290
        %v292 = vpop.xlane.xlu0 %291
        %v293 = vmul.f32 %v292, %v286
        %v294 = vadd.f32 %v293, 1e-05
        %v295 = vrsqrt.pop %v294
        %v296 = vmul.f32 %v295, %v294
        %v297 = vmul.f32 %v296, %v295
        %v298 = vmul.f32 0.5, %v297
        %v299 = vsub.f32 1.5, %v298
        %v300 = vmul.f32 %v295, %v299
        %vm301 = vweird.f32 %v294
        %vm302 = vweird.f32 %v295
        %vm303 = vmor %vm301, %vm302
        %v304 = vsel %vm303, %v295, %v300
        %v305 = vmul.f32 %v288, %v304
        %v306 = vld [vmem:[%s1] sm:$0x1]
        %v308 = vperm.slane %v306, 0
        %v310 = vmul.f32 %v305, %v308
        %v311 = vld [vmem:[%s2] sm:$0x1]
        %v313 = vperm.slane %v311, 0
        %v315 = vadd.f32 %v310, %v313
        %v316 = vpack.c.bf16 %v315, %v315
        %v317 = vld [vmem:[%s3] sm:$0xf]
        %v318 = vld [vmem:[%s3 + $0x4] sm:$0xf]
        %v319 = vld [vmem:[%s3 + $0x8] sm:$0xf]
        %v320 = vld [vmem:[%s3 + $0xc] sm:$0xf]
        %v321 = vld [vmem:[%s4] sm:$0xff]
        %v322 = vld [vmem:[%s4 + $0x8] sm:$0xff]
        %v323 = vld [vmem:[%s4 + $0x10] sm:$0xff]
        %v324 = vld [vmem:[%s4 + $0x18] sm:$0xff]
        %v325 = vld [vmem:[%s5] sm:$0xf]
        %327 = vset.pattern.permute.xlu0 0
        %328 = vperm.xlu0 %327, %v321
        %v329 = vpop.permute.xlu0 %328
        %332 = vset.pattern.permute.xlu0 0
        %333 = vperm.xlu0 %332, %v322
        %v334 = vpop.permute.xlu0 %333
        %337 = vset.pattern.permute.xlu0 0
        %338 = vperm.xlu0 %337, %v323
        %v339 = vpop.permute.xlu0 %338
        %342 = vset.pattern.permute.xlu0 0
        %343 = vperm.xlu0 %342, %v324
        %v344 = vpop.permute.xlu0 %343
        %v350 = vunpack.c.l.b16 %v317
        %v351 = vunpack.c.l.b16 %v318
        %v352 = vunpack.c.l.b16 %v319
        %v353 = vunpack.c.l.b16 %v320
        %v354 = vpack.c.b16 %v351, %v350
        %v355 = vpack.c.b16 %v353, %v352
        %vm356 = vcmask 64512
        %v358 = vsel %vm356, %v354, 0
        %v361 = vsel %vm356, %v355, 0
        %vm363 = vcmask 1043456
        %v365 = vsel %vm363, %v316, 0
        %367 = vmatpush.bf16.msra.mxu0 0
        %368 = vmatpush.bf16.msra.mxu0 0
        %369 = vmatpush.bf16.msra.mxu0 0
        %370 = vmatpush.bf16.msra.mxu0 0
        %371 = vmatpush.bf16.msra.mxu0 0
        %372 = vmatpush.bf16.msra.mxu0 0
        %373 = vmatpush.bf16.msra.mxu0 0
        %374 = vmatpush.bf16.msra.mxu0 %v365
        %375 = vmatmul.bf16.gmra.mxu0 %v358
        %v376 = vpop.f32.mrf.mxu0
        %v377 = vadd.f32 %v329, %v376
        %v378 = vpop.f32.mrf.mxu0
        %v379 = vadd.f32 %v334, %v378
        %380 = vmatmul.bf16.gmra.mxu0 %v361
        %v381 = vpop.f32.mrf.mxu0
        %v382 = vadd.f32 %v339, %v381
        %v383 = vpop.f32.mrf.mxu0
        %v384 = vadd.f32 %v344, %v383
        %385 = vdwg.mxu0
        %v386 = vmul.f32 %v377, %v377
        %v387 = vmul.f32 %v379, %v379
        %v388 = vmul.f32 %v382, %v382
        %v389 = vmul.f32 %v384, %v384
        %v390 = vmul.f32 %v377, %v386
        %v391 = vmul.f32 %v379, %v387
        %v392 = vmul.f32 %v382, %v388
        %v393 = vmul.f32 %v384, %v389
        %v394 = vmul.f32 %v390, 0.044715
        %v395 = vmul.f32 %v391, 0.044715
        %v396 = vmul.f32 %v392, 0.044715
        %v397 = vmul.f32 %v393, 0.044715
        %v398 = vadd.f32 %v377, %v394
        %v399 = vadd.f32 %v379, %v395
        %v400 = vadd.f32 %v382, %v396
        %v401 = vadd.f32 %v384, %v397
        %v402 = vmul.f32 %v398, 0.7978846
        %v403 = vmul.f32 %v399, 0.7978846
        %v404 = vmul.f32 %v400, 0.7978846
        %v405 = vmul.f32 %v401, 0.7978846
        %v406 = vtanh.pop %v402
        %v407 = vtanh.pop %v403
        %v408 = vtanh.pop %v404
        %v409 = vtanh.pop %v405
        %v410 = vadd.f32 %v406, 1.0
        %v411 = vadd.f32 %v407, 1.0
        %v412 = vadd.f32 %v408, 1.0
        %v413 = vadd.f32 %v409, 1.0
        %v414 = vmul.f32 %v410, 0.5
        %v415 = vmul.f32 %v411, 0.5
        %v416 = vmul.f32 %v412, 0.5
        %v417 = vmul.f32 %v413, 0.5
        %v418 = vmul.f32 %v377, %v414
        %v419 = vmul.f32 %v379, %v415
        %v420 = vmul.f32 %v382, %v416
        %v421 = vmul.f32 %v384, %v417
        %v422 = vpack.c.bf16 %v419, %v418
        %v423 = vpack.c.bf16 %v421, %v420
        %v424 = vld [vmem:[%s6] sm:$0xff]
        %426 = vset.pattern.permute.xlu0 0
        %427 = vperm.xlu0 %426, %v424
        %v428 = vpop.permute.xlu0 %427
        %vm430 = vcmask 261120
        %v432 = vsel %vm430, %v325, 0
        %434 = vmatpush.bf16.msra.mxu0 0
        %435 = vmatpush.bf16.msra.mxu0 0
        %436 = vmatpush.bf16.msra.mxu0 0
        %437 = vmatpush.bf16.msra.mxu0 0
        %438 = vmatpush.bf16.msra.mxu0 0
        %439 = vmatpush.bf16.msra.mxu0 0
        %440 = vmatpush.bf16.msra.mxu0 %v423
        %441 = vmatpush.bf16.msra.mxu0 %v422
        %442 = vmatmul.bf16.gmra.mxu0 %v432
        %v443 = vpop.f32.mrf.mxu0
        %v444 = vadd.f32 %v428, %v443
        %v445 = vpop.f32.mrf.mxu0
        %446 = vdwg.mxu0
        %v447 = vadd.f32 %v444, %v275
        %448 = vst.msk [vmem:[%s269] sm:$0xff] %vm276, %v447
        %s449 = sand.u32 %s181, 1
        %s450 = scalar_lea.sflag [#allocation3], %s449
        %s451 = sand.u32 %s181, 1
        %s452 = smul.addr %s451, 8
        %s453 = scalar_lea.vmem [#allocation2], %s452
        // Predicated region
        $region49: #{mlp1_forward.1} parent=47 // pred_check
          %p454 = pneg %p191
        $region50: #{mlp1_forward.1} parent=47 // pred_check_branch
          %456 = sbr.rel (%p454) target = $region52
        $region51: #{mlp1_forward.1} parent=47 // pred_region
          %458 = vsyncadd %s450, 0
          %s459 = smul.addr %s21, 8
          %s460 = scalar_lea.hbm %s7, %s459
          %s462 = sshll.u32 %s453, 4
          %s463 = int_to_ptr.vmem [resolvable:$true] %s462
          %s464 = sshll.u32 %s460, 4
          %s465 = int_to_ptr.hbm [resolvable:$true] %s464
          %467 = dma.vmem_to_hbm [thread:$0]  %s463, 128, %s465, %s450
        $region52: #{mlp1_forward.1} parent=47 // pred_fallthru
          _
      $region48: #{mlp1_forward.1} parent=5 // pred_fallthru
        _
      %p468 = scmp.le.s32.totalorder 2, %s16
      // Predicated region
      $region53: #{mlp1_forward.1} parent=5 // pred_check
        %p469 = pneg %p468
      $region54: #{mlp1_forward.1} parent=5 // pred_check_branch
        %471 = sbr.rel (%p469) target = $region56
      $region55: #{mlp1_forward.1} parent=5 // pred_region
        %s472 = ssub.s32 %s16, 2
        // Predicated region
        $region57: #{mlp1_forward.1} parent=55 // pred_check
          %p473 = pneg %p197
        $region58: #{mlp1_forward.1} parent=55 // pred_check_branch
          %475 = sbr.rel (%p473) target = $region60
        $region59: #{mlp1_forward.1} parent=55 // pred_region
          %s476 = sand.u32 %s182, 1
          %s477 = scalar_lea.sflag [#allocation3], %s476
          %s478 = sand.u32 %s182, 1
          %s479 = smul.addr %s478, 8
          %s480 = scalar_lea.vmem [#allocation2], %s479
          %482 = dma.done %s477, 128
        $region60: #{mlp1_forward.1} parent=55 // pred_fallthru
          _
      $region56: #{mlp1_forward.1} parent=5 // pred_fallthru
        _
    $region6: #{mlp1_forward.1} parent=1 // loop_footer
      %s20 = sadd.s32 1, %s16
    $region7: #{mlp1_forward.1} parent=1 // loop_footer_branch
      %15 = sbr.rel target = $region3
    $region8: #{mlp1_forward.1} parent=1 // loop_exit
      _
    %483 = vsyncpa [#allocation3], 1
    %s484 = scalar_lea.sflag [#allocation3], 1
    %485 = vsyncpa %s484, 1

</llo_original>
